<compile_context>
chip_gen: v7x
topology: tpu7x:2x2x1
jax: 0.10.0
libtpu: 0.0.40
codegen_flags: <defaults>
</compile_context>

<pallas_src>
import functools

import jax
import jax.numpy as jnp
from jax.experimental import pallas as pl
from jax.experimental.pallas import tpu as pltpu


def _round_up(x: int, m: int) -> int:
    return ((x + m - 1) // m) * m


def _mlp_relu_kernel(x_ref, w1_ref, b1_ref, w2_ref, b2_ref, out_ref):
    # x_ref : (1, TN)   -- batch on lanes
    # w1_ref: (H, 1), b1_ref: (H, 1), w2_ref: (H, 1), b2_ref: (1, 1)
    x = x_ref[...]                                          # (1, TN)
    # layer 1: outer product + bias + ReLU, all on the VPU
    h = jnp.maximum(w1_ref[...] * x + b1_ref[...], 0.0)     # (H, TN)
    # layer 2: weighted cross-sublane reduce (XLU) + bias
    y = jnp.sum(h * w2_ref[...], axis=0, keepdims=True)     # (1, TN)
    out_ref[...] = (y + b2_ref[...]).astype(out_ref.dtype)


@functools.partial(jax.jit, static_argnames=("tile_n",))
def net_relu_forward(x, w1, b1, w2, b2, tile_n: int = 2048):
    """Forward pass of Net_relu.

    x : (N, D_in=1) f32
    w1: (D_in=1, H) f32   (PyTorch linear1.weight, transposed to (in, out))
    b1: (1, H)      f32
    w2: (H, D_out=1) f32  (PyTorch linear2.weight, transposed to (in, out))
    b2: (1, D_out=1) f32
    returns (N, 1) f32
    """
    n, d_in = x.shape
    h_dim = w1.shape[1]
    d_out = w2.shape[1]
    # Kernel is specialized for the module's usage (scalar in / scalar out).
    # TODO(synk): add a generic MXU matmul path for D_in > 1 or D_out > 1.
    assert d_in == 1 and d_out == 1, "kernel specialized for D_in = D_out = 1"

    # --- relayout: batch N onto the lane axis, weights as (H, 1) columns ---
    x_t = x.reshape(1, n)                     # (1, N)
    w1_col = w1.reshape(h_dim, 1)             # (H, 1)
    b1_col = b1.reshape(h_dim, 1)             # (H, 1)
    w2_col = w2.reshape(h_dim, 1)             # (H, 1)
    b2_sc = b2.reshape(1, 1)                  # (1, 1)

    # --- lane-aligned tiling over N (always a multiple of 128 lanes) ---
    tile = min(tile_n, _round_up(n, 128))
    n_pad = _round_up(n, tile)
    if n_pad != n:
        x_t = jnp.pad(x_t, ((0, 0), (0, n_pad - n)))
    grid = (n_pad // tile,)

    out = pl.pallas_call(
        _mlp_relu_kernel,
        out_shape=jax.ShapeDtypeStruct((1, n_pad), jnp.float32),
        grid_spec=pltpu.PrefetchScalarGridSpec(
            num_scalar_prefetch=0,
            grid=grid,
            in_specs=[
                pl.BlockSpec((1, tile), lambda i: (0, i)),        # x tile
                pl.BlockSpec((h_dim, 1), lambda i: (0, 0)),       # w1 (resident)
                pl.BlockSpec((h_dim, 1), lambda i: (0, 0)),       # b1 (resident)
                pl.BlockSpec((h_dim, 1), lambda i: (0, 0)),       # w2 (resident)
                pl.BlockSpec((1, 1), lambda i: (0, 0)),           # b2 (resident)
            ],
            out_specs=pl.BlockSpec((1, tile), lambda i: (0, i)),
        ),
        compiler_params=pltpu.CompilerParams(
            dimension_semantics=("parallel",),
        ),
    )(x_t, w1_col, b1_col, w2_col, b2_sc)

    # back to PyTorch layout (N, 1)
    return out[:, :n].reshape(n, 1)


def init_params(key, d_in, h, d_out):
    """Deterministic init matching nn.Linear's U(-1/sqrt(fan_in), 1/sqrt(fan_in))."""
    k1, k2, k3, k4 = jax.random.split(key, 4)
    bound1 = 1.0 / jnp.sqrt(jnp.float32(d_in))
    bound2 = 1.0 / jnp.sqrt(jnp.float32(h))
    # stored as (in, out) == transpose of PyTorch's (out, in) weight layout
    w1 = jax.random.uniform(k1, (d_in, h), jnp.float32, -bound1, bound1)
    b1 = jax.random.uniform(k2, (1, h), jnp.float32, -bound1, bound1)
    w2 = jax.random.uniform(k3, (h, d_out), jnp.float32, -bound2, bound2)
    b2 = jax.random.uniform(k4, (1, d_out), jnp.float32, -bound2, bound2)
    return w1, b1, w2, b2


if __name__ == "__main__":
    # Matches the script's example input: x = torch.arange(-2, 2, 0.1).view(-1, 1)
    D_in, H, D_out = 1, 32, 1
    x_small = jnp.arange(-2.0, 2.0, 0.1, dtype=jnp.float32).reshape(-1, 1)  # (40, 1)

    w1, b1, w2, b2 = init_params(jax.random.PRNGKey(0), D_in, H, D_out)

    def ref(xv):
        return jnp.maximum(xv @ w1 + b1, 0.0) @ w2 + b2

    # 1) the module's actual example input (single grid step, padded to 128 lanes)
    y = net_relu_forward(x_small, w1, b1, w2, b2)
    jax.block_until_ready(y)
    assert y.shape == (x_small.shape[0], D_out)
    assert jnp.allclose(y, ref(x_small), atol=1e-5, rtol=1e-5)

    # 2) a larger, non-tile-aligned batch to exercise multi-tile pipelining + padding
    x_big = jax.random.uniform(
        jax.random.PRNGKey(1), (4096 + 300, 1), jnp.float32, -2.0, 2.0
    )
    y_big = net_relu_forward(x_big, w1, b1, w2, b2)
    jax.block_until_ready(y_big)
    assert y_big.shape == (4396, 1)
    assert jnp.allclose(y_big, ref(x_big), atol=1e-5, rtol=1e-5)

    print("KERNEL_OK")
</pallas_src>

<mosaic_0001>
module attributes {stable_mosaic.version = 11 : i64} {
  func.func @_mlp_relu_kernel(%arg0: i32, %arg1: memref<1x128xf32, #tpu.memory_space<vmem>>, %arg2: memref<32x1xf32, #tpu.memory_space<vmem>>, %arg3: memref<32x1xf32, #tpu.memory_space<vmem>>, %arg4: memref<32x1xf32, #tpu.memory_space<vmem>>, %arg5: memref<1x1xf32, #tpu.memory_space<vmem>>, %arg6: memref<1x128xf32, #tpu.memory_space<vmem>>) attributes {dimension_semantics = [#tpu.dimension_semantics<parallel>], iteration_bounds = array<i64: 1>, scalar_prefetch = 0 : i64, scratch_operands = 0 : i64, tpu.core_type = #tpu.core_type<tc>, window_params = [{transform_indices = @transform_0, window_bounds = array<i64: 1, 128>}, {pipeline_mode = #tpu.pipeline_mode<synchronous>, transform_indices = @transform_1, window_bounds = array<i64: 32, 1>}, {pipeline_mode = #tpu.pipeline_mode<synchronous>, transform_indices = @transform_2, window_bounds = array<i64: 32, 1>}, {pipeline_mode = #tpu.pipeline_mode<synchronous>, transform_indices = @transform_3, window_bounds = array<i64: 32, 1>}, {pipeline_mode = #tpu.pipeline_mode<synchronous>, transform_indices = @transform_4, window_bounds = array<i64: 1, 1>}, {transform_indices = @transform_5, window_bounds = array<i64: 1, 128>}]} {
    %c0 = arith.constant 0 : index
    %c0_0 = arith.constant 0 : index
    %0 = vector.load %arg1[%c0, %c0_0] : memref<1x128xf32, #tpu.memory_space<vmem>>, vector<1x128xf32>
    %c0_1 = arith.constant 0 : index
    %c0_2 = arith.constant 0 : index
    %1 = vector.load %arg2[%c0_1, %c0_2] : memref<32x1xf32, #tpu.memory_space<vmem>>, vector<32x1xf32>
    %2 = vector.broadcast %1 : vector<32x1xf32> to vector<32x128xf32>
    %3 = vector.broadcast %0 : vector<1x128xf32> to vector<32x128xf32>
    %4 = arith.mulf %2, %3 : vector<32x128xf32>
    %c0_3 = arith.constant 0 : index
    %c0_4 = arith.constant 0 : index
    %5 = vector.load %arg3[%c0_3, %c0_4] : memref<32x1xf32, #tpu.memory_space<vmem>>, vector<32x1xf32>
    %6 = vector.broadcast %5 : vector<32x1xf32> to vector<32x128xf32>
    %7 = arith.addf %4, %6 : vector<32x128xf32>
    %cst = arith.constant 0.000000e+00 : f32
    %8 = vector.broadcast %cst : f32 to vector<32x128xf32>
    %9 = arith.maximumf %7, %8 : vector<32x128xf32>
    %c0_5 = arith.constant 0 : index
    %c0_6 = arith.constant 0 : index
    %10 = vector.load %arg4[%c0_5, %c0_6] : memref<32x1xf32, #tpu.memory_space<vmem>>, vector<32x1xf32>
    %11 = vector.broadcast %10 : vector<32x1xf32> to vector<32x128xf32>
    %12 = arith.mulf %9, %11 : vector<32x128xf32>
    %cst_7 = arith.constant dense<0.000000e+00> : vector<128xf32>
    %13 = vector.multi_reduction <add>, %12, %cst_7 [0] : vector<32x128xf32> to vector<128xf32>
    %14 = vector.shape_cast %13 : vector<128xf32> to vector<1x128xf32>
    %c0_8 = arith.constant 0 : index
    %c0_9 = arith.constant 0 : index
    %15 = vector.load %arg5[%c0_8, %c0_9] : memref<1x1xf32, #tpu.memory_space<vmem>>, vector<1x1xf32>
    %16 = vector.broadcast %15 : vector<1x1xf32> to vector<1x128xf32>
    %17 = arith.addf %14, %16 : vector<1x128xf32>
    %c0_10 = arith.constant 0 : index
    %c0_11 = arith.constant 0 : index
    %18 = vector.load %arg6[%c0_10, %c0_11] : memref<1x128xf32, #tpu.memory_space<vmem>>, vector<1x128xf32>
    tpu.vector_store %arg6[%c0_10, %c0_11], %17 {strides = array<i32>} : memref<1x128xf32, #tpu.memory_space<vmem>>, vector<1x128xf32>,
    return
  }
  func.func @transform_0(%arg0: i32) -> (i32, i32) {
    %c0_i32 = arith.constant 0 : i32
    %c0_i32_0 = arith.constant 0 : i32
    return %c0_i32, %arg0 : i32, i32
  }
  func.func @transform_1(%arg0: i32) -> (i32, i32) {
    %c0_i32 = arith.constant 0 : i32
    %c0_i32_0 = arith.constant 0 : i32
    %c0_i32_1 = arith.constant 0 : i32
    return %c0_i32, %c0_i32_0 : i32, i32
  }
  func.func @transform_2(%arg0: i32) -> (i32, i32) {
    %c0_i32 = arith.constant 0 : i32
    %c0_i32_0 = arith.constant 0 : i32
    %c0_i32_1 = arith.constant 0 : i32
    return %c0_i32, %c0_i32_0 : i32, i32
  }
  func.func @transform_3(%arg0: i32) -> (i32, i32) {
    %c0_i32 = arith.constant 0 : i32
    %c0_i32_0 = arith.constant 0 : i32
    %c0_i32_1 = arith.constant 0 : i32
    return %c0_i32, %c0_i32_0 : i32, i32
  }
  func.func @transform_4(%arg0: i32) -> (i32, i32) {
    %c0_i32 = arith.constant 0 : i32
    %c0_i32_0 = arith.constant 0 : i32
    %c0_i32_1 = arith.constant 0 : i32
    return %c0_i32, %c0_i32_0 : i32, i32
  }
  func.func @transform_5(%arg0: i32) -> (i32, i32) {
    %c0_i32 = arith.constant 0 : i32
    %c0_i32_0 = arith.constant 0 : i32
    return %c0_i32, %arg0 : i32, i32
  }
}

</mosaic_0001>

<llo_original>
// kernel: net_relu_forward.1
$region0: #{net_relu_forward.1}
  #allocation0 [shape = 'u32[]', space=smem, size = 0x4, offset = 0x4, fixed_abs, tag = 'smem constant byte address 0x4 - core index']
  #allocation1 [shape = 'u32[144,128]{1,0:T(1,128)}', space=vmem, size = 0x12000, scoped, tag = 'internal scratch']
  #allocation2 [shape = 'f32[1,1]{1,0:T(1,128)S(1)}', space=vmem, size = 0x200, scoped, tag = 'scoped memory for net_relu_forward.1']
  %s0 = inlined_call_operand.vmem [shape: f32[1,128], index: 0, kind: input, shape index: {}]
  %s1 = inlined_call_operand.vmem [shape: f32[32,1], index: 1, kind: input, shape index: {}]
  %s2 = inlined_call_operand.vmem [shape: f32[32,1], index: 2, kind: input, shape index: {}]
  %s3 = inlined_call_operand.vmem [shape: f32[32,1], index: 3, kind: input, shape index: {}]
  %s4 = inlined_call_operand.<no memory space> [shape: f32[1,1], index: 4, kind: input, shape index: {}]
  %s5 = inlined_call_operand.vmem [shape: f32[1,128], index: 5, kind: output, shape index: {}]
  %s6 = sld [smem:[#allocation0]]
  $region30: #{net_relu_forward.1} parent=0
    _
  %s8 = ssub.s32 1, %s6
  %s9 = scalar_select 0, %s8, %s6
  %v10 = vstv %s4
  %11 = vst [vmem:[#allocation2] sm:$0x1] %v10
  // Predicated region
  $region2: #{net_relu_forward.1} parent=0 // pred_check
    _
  $region3: #{net_relu_forward.1} parent=0 // pred_check_branch
    %13 = sbr.rel (0) target = $region5
  $region4: #{net_relu_forward.1} parent=0 // pred_region
    _
  $region5: #{net_relu_forward.1} parent=0 // pred_fallthru
    _
  // Predicated region
  $region6: #{net_relu_forward.1} parent=0 // pred_check
    _
  $region7: #{net_relu_forward.1} parent=0 // pred_check_branch
    %15 = sbr.rel (0) target = $region9
  $region8: #{net_relu_forward.1} parent=0 // pred_region
    _
  $region9: #{net_relu_forward.1} parent=0 // pred_fallthru
    _
  // Predicated region
  $region10: #{net_relu_forward.1} parent=0 // pred_check
    _
  $region11: #{net_relu_forward.1} parent=0 // pred_check_branch
    %17 = sbr.rel (0) target = $region13
  $region12: #{net_relu_forward.1} parent=0 // pred_region
    _
  $region13: #{net_relu_forward.1} parent=0 // pred_fallthru
    _
  // Predicated region
  $region14: #{net_relu_forward.1} parent=0 // pred_check
    _
  $region15: #{net_relu_forward.1} parent=0 // pred_check_branch
    %19 = sbr.rel (0) target = $region17
  $region16: #{net_relu_forward.1} parent=0 // pred_region
    _
  $region17: #{net_relu_forward.1} parent=0 // pred_fallthru
    _
  // Predicated region
  $region18: #{net_relu_forward.1} parent=0 // pred_check
    _
  $region19: #{net_relu_forward.1} parent=0 // pred_check_branch
    %21 = sbr.rel (0) target = $region21
  $region20: #{net_relu_forward.1} parent=0 // pred_region
    _
  $region21: #{net_relu_forward.1} parent=0 // pred_fallthru
    _
  %v22 = vld [vmem:[%s0] sm:$0x1]
  %v23 = vld [vmem:[%s1] sm:$0xff]
  %v24 = vld [vmem:[%s1 + $0x8] sm:$0xff]
  %v25 = vld [vmem:[%s1 + $0x10] sm:$0xff]
  %v26 = vld [vmem:[%s1 + $0x18] sm:$0xff]
  %28 = vset.pattern.permute.xlu0 0
  %29 = vperm.xlu0 %28, %v23
  %v30 = vpop.permute.xlu0 %29
  %33 = vset.pattern.permute.xlu0 0
  %34 = vperm.xlu0 %33, %v24
  %v35 = vpop.permute.xlu0 %34
  %38 = vset.pattern.permute.xlu0 0
  %39 = vperm.xlu0 %38, %v25
  %v40 = vpop.permute.xlu0 %39
  %43 = vset.pattern.permute.xlu0 0
  %44 = vperm.xlu0 %43, %v26
  %v45 = vpop.permute.xlu0 %44
  %v48 = vlaneseq
  %v49 = vshrl.u32 %v48, 7
  %v50 = vsub.s32 0, %v49
  %v51 = vrot.slane %v22, %v50
  %v53 = vmul.f32 %v30, %v51
  %v54 = vmul.f32 %v35, %v51
  %v55 = vmul.f32 %v40, %v51
  %v56 = vmul.f32 %v45, %v51
  %v57 = vld [vmem:[%s2] sm:$0xff]
  %v58 = vld [vmem:[%s2 + $0x8] sm:$0xff]
  %v59 = vld [vmem:[%s2 + $0x10] sm:$0xff]
  %v60 = vld [vmem:[%s2 + $0x18] sm:$0xff]
  %62 = vset.pattern.permute.xlu0 0
  %63 = vperm.xlu0 %62, %v57
  %v64 = vpop.permute.xlu0 %63
  %67 = vset.pattern.permute.xlu0 0
  %68 = vperm.xlu0 %67, %v58
  %v69 = vpop.permute.xlu0 %68
  %72 = vset.pattern.permute.xlu0 0
  %73 = vperm.xlu0 %72, %v59
  %v74 = vpop.permute.xlu0 %73
  %77 = vset.pattern.permute.xlu0 0
  %78 = vperm.xlu0 %77, %v60
  %v79 = vpop.permute.xlu0 %78
  %v81 = vadd.f32 %v53, %v64
  %v82 = vadd.f32 %v54, %v69
  %v83 = vadd.f32 %v55, %v74
  %v84 = vadd.f32 %v56, %v79
  %v85 = vmax.f32 %v81, 0.0
  %v86 = vmax.f32 %v82, 0.0
  %v87 = vmax.f32 %v83, 0.0
  %v88 = vmax.f32 %v84, 0.0
  %v89 = vld [vmem:[%s3] sm:$0xff]
  %v90 = vld [vmem:[%s3 + $0x8] sm:$0xff]
  %v91 = vld [vmem:[%s3 + $0x10] sm:$0xff]
  %v92 = vld [vmem:[%s3 + $0x18] sm:$0xff]
  %94 = vset.pattern.permute.xlu0 0
  %95 = vperm.xlu0 %94, %v89
  %v96 = vpop.permute.xlu0 %95
  %99 = vset.pattern.permute.xlu0 0
  %100 = vperm.xlu0 %99, %v90
  %v101 = vpop.permute.xlu0 %100
  %104 = vset.pattern.permute.xlu0 0
  %105 = vperm.xlu0 %104, %v91
  %v106 = vpop.permute.xlu0 %105
  %109 = vset.pattern.permute.xlu0 0
  %110 = vperm.xlu0 %109, %v92
  %v111 = vpop.permute.xlu0 %110
  %v113 = vmul.f32 %v85, %v96
  %v114 = vmul.f32 %v86, %v101
  %v115 = vmul.f32 %v87, %v106
  %v116 = vmul.f32 %v88, %v111
  %v117 = vadd.f32 %v113, %v114
  %v118 = vadd.f32 %v117, %v115
  %v119 = vadd.f32 %v118, %v116
  %v120 = vrot.slane %v119, 4
  %v121 = vadd.f32 %v119, %v120
  %v122 = vrot.slane %v121, 2
  %v123 = vadd.f32 %v121, %v122
  %v124 = vrot.slane %v123, 1
  %v125 = vadd.f32 %v123, %v124
  %v126 = vld [vmem:[#allocation2] sm:$0x1]
  %128 = vset.pattern.permute.xlu0 0
  %129 = vperm.xlu0 %128, %v126
  %v130 = vpop.permute.xlu0 %129
  %v132 = vlaneseq
  %v133 = vshrl.u32 %v132, 7
  %v134 = vsub.s32 0, %v133
  %v135 = vrot.slane %v130, %v134
  %v136 = vadd.f32 %v125, %v135
  %137 = vst [vmem:[%s5] sm:$0x1] %v136
  // Predicated region
  $region22: #{net_relu_forward.1} parent=0 // pred_check
    _
  $region23: #{net_relu_forward.1} parent=0 // pred_check_branch
    %139 = sbr.rel (0) target = $region25
  $region24: #{net_relu_forward.1} parent=0 // pred_region
    _
  $region25: #{net_relu_forward.1} parent=0 // pred_fallthru
    _
  // Predicated region
  $region26: #{net_relu_forward.1} parent=0 // pred_check
    _
  $region27: #{net_relu_forward.1} parent=0 // pred_check_branch
    %141 = sbr.rel (0) target = $region29
  $region28: #{net_relu_forward.1} parent=0 // pred_region
    _
  $region29: #{net_relu_forward.1} parent=0 // pred_fallthru
    _

</llo_original>
